<compile_context>
chip_gen: v5e
topology: v5e:2x2
jax: 0.10.0
libtpu: 0.0.40
codegen_flags: <defaults>
</compile_context>

<pallas_src>
from collections import namedtuple

import numpy as np
import jax
import jax.numpy as jnp
from jax.experimental import pallas as pl
from jax.experimental.pallas import tpu as pltpu

LANE = 128
TILE_ROWS = 1024  # (1024 x 128) f32 tile = 512 KiB per input per buffer
PER_TILE = TILE_ROWS * LANE

Genotype = namedtuple(
    "Genotype",
    "normal normal_concat reduce reduce_concat init_channels num_classes layers nodes",
)

PRIMITIVES = [
    "none", "max_pool_3x3", "avg_pool_3x3", "skip_connect",
    "sep_conv_3x3", "sep_conv_5x5", "dil_conv_3x3", "dil_conv_5x5",
]


# ----------------------------- Pallas kernels --------------------------------
def _seg_norm_kernel(seg_ref, x_ref, o_ref, acc_ref):
    """Segmented sum(x*x): per-segment sqrt written to a lane-dense output row."""
    i = pl.program_id(0)
    n = pl.num_programs(0)
    seg = seg_ref[i]

    @pl.when(i == 0)
    def _():
        o_ref[...] = jnp.zeros_like(o_ref)

    prev_seg = seg_ref[jnp.maximum(i - 1, 0)]

    @pl.when(jnp.logical_or(i == 0, prev_seg != seg))
    def _():
        acc_ref[...] = jnp.zeros_like(acc_ref)

    x = x_ref[...].astype(jnp.float32)
    # Per-lane partial sums only (VPU); cross-lane reduce deferred to seg end.
    acc_ref[...] += jnp.sum(x * x, axis=0, keepdims=True)

    next_seg = seg_ref[jnp.minimum(i + 1, n - 1)]

    @pl.when(jnp.logical_or(i == n - 1, next_seg != seg))
    def _():
        norm = jnp.sqrt(jnp.sum(acc_ref[...]))
        lane = jax.lax.broadcasted_iota(jnp.int32, o_ref.shape, 1)
        o_ref[...] = jnp.where(lane == seg, norm, o_ref[...])


def _seg_diff_norm_kernel(seg_ref, a_ref, b_ref, o_ref, acc_ref):
    """Segmented sum((a-b)^2): per-segment sqrt written lane-dense."""
    i = pl.program_id(0)
    n = pl.num_programs(0)
    seg = seg_ref[i]

    @pl.when(i == 0)
    def _():
        o_ref[...] = jnp.zeros_like(o_ref)

    prev_seg = seg_ref[jnp.maximum(i - 1, 0)]

    @pl.when(jnp.logical_or(i == 0, prev_seg != seg))
    def _():
        acc_ref[...] = jnp.zeros_like(acc_ref)

    d = a_ref[...].astype(jnp.float32) - b_ref[...].astype(jnp.float32)
    acc_ref[...] += jnp.sum(d * d, axis=0, keepdims=True)

    next_seg = seg_ref[jnp.minimum(i + 1, n - 1)]

    @pl.when(jnp.logical_or(i == n - 1, next_seg != seg))
    def _():
        norm = jnp.sqrt(jnp.sum(acc_ref[...]))
        lane = jax.lax.broadcasted_iota(jnp.int32, o_ref.shape, 1)
        o_ref[...] = jnp.where(lane == seg, norm, o_ref[...])


# ----------------------------- packing + wrappers ----------------------------
def _pack(tensors):
    """Flatten, tile-pad and concatenate all tensors into one (rows, 128) buffer.

    Returns (packed, seg_ids) where seg_ids[i] is the segment index of tile i.
    Zero padding contributes nothing to the sum of squares, so no in-kernel
    masking is needed (each segment occupies a whole number of tiles).
    """
    parts = []
    seg_ids = []
    for s, t in enumerate(tensors):
        flat = jnp.ravel(t).astype(jnp.float32)
        n_tiles = max(1, pl.cdiv(int(flat.shape[0]), PER_TILE))
        parts.append(jnp.pad(flat, (0, n_tiles * PER_TILE - flat.shape[0])))
        seg_ids += [s] * n_tiles
    packed = jnp.concatenate(parts).reshape(-1, LANE)
    seg_ids = jnp.asarray(np.asarray(seg_ids, dtype=np.int32))
    return packed, seg_ids


def _run_segmented(kernel, seg_ids, num_segments, *packed_inputs):
    num_tiles = int(seg_ids.shape[0])
    nseg_pad = pl.cdiv(num_segments, LANE) * LANE
    in_specs = [pl.BlockSpec((TILE_ROWS, LANE), lambda i, seg: (i, 0))
                for _ in packed_inputs]
    out = pl.pallas_call(
        kernel,
        out_shape=jax.ShapeDtypeStruct((1, nseg_pad), jnp.float32),
        grid_spec=pltpu.PrefetchScalarGridSpec(
            num_scalar_prefetch=1,
            grid=(num_tiles,),
            in_specs=in_specs,
            out_specs=pl.BlockSpec((1, nseg_pad), lambda i, seg: (0, 0)),
            scratch_shapes=[pltpu.VMEM((1, LANE), jnp.float32)],
        ),
        compiler_params=pltpu.CompilerParams(
            dimension_semantics=("arbitrary",)),
    )(seg_ids, *packed_inputs)
    return out[0, :num_segments]


@jax.jit
def batched_l2_norms(*tensors):
    """||t||_2 for every tensor, computed in a single segmented Pallas kernel."""
    packed, seg_ids = _pack(tensors)
    return _run_segmented(_seg_norm_kernel, seg_ids, len(tensors), packed)


@jax.jit
def batched_l2_diff_norms(tensors_a, tensors_b):
    """||a - b||_2 per tensor pair, single segmented Pallas kernel."""
    packed_a, seg_ids = _pack(tensors_a)
    packed_b, _ = _pack(tensors_b)
    return _run_segmented(_seg_diff_norm_kernel, seg_ids, len(tensors_a),
                          packed_a, packed_b)


def pallas_l2_norm(a):
    return batched_l2_norms(a)[0]


def pallas_l2_diff_norm(a, b):
    return batched_l2_diff_norms((a,), (b,))[0]


# ----------------------------- SuperNetwork ----------------------------------
class SuperNetwork:
    """JAX/Pallas port of the tensor compute in the DARTS SuperNetwork base class."""

    def __init__(self, C, num_classes, nodes, layers, criterion=None):
        self._C = C
        self._nodes = nodes
        self._steps = nodes
        self._multiplier = nodes
        self._num_classes = num_classes
        self._layers = layers
        self._criterion = criterion
        self.op_names = PRIMITIVES
        self.alphas = None
        self.edges = None
        self.init_parameters = {}

        # Deterministic synthetic parameters (shapes implied by a DARTS supernet).
        k = sum(range(2, nodes + 2))  # number of edges in the DAG
        num_ops = len(PRIMITIVES)
        keys = jax.random.split(jax.random.PRNGKey(0), 5)
        self.params = {
            "alphas_normal": 1e-3 * jax.random.normal(keys[0], (k, num_ops), jnp.float32),
            "alphas_reduce": 1e-3 * jax.random.normal(keys[1], (k, num_ops), jnp.float32),
            "stem.weight": 0.1 * jax.random.normal(keys[2], (C, 3, 3, 3), jnp.float32),
            "classifier.weight": 0.1 * jax.random.normal(
                keys[3], (num_classes, C * nodes), jnp.float32),
            "classifier.bias": jnp.zeros((num_classes,), jnp.float32),
        }

    # TODO(synk): forward()/new()/_loss() are abstract in the PyTorch base class
    # (require a concrete cell topology + criterion); no Pallas equivalent here.
    def forward(self, input, discrete):
        raise NotImplementedError

    def named_parameters(self):
        return self.params.items()

    def store_init_weights(self):
        self.init_parameters = {name: jnp.array(w) for name, w in self.named_parameters()}

    def get_save_states(self):
        return {"state_dict": dict(self.params),
                "init_parameters": dict(self.init_parameters)}

    def load_states(self, save_states):
        self.params = dict(save_states["state_dict"])
        self.init_parameters = dict(save_states["init_parameters"])

    def compute_norm(self, from_init=False):
        # Hot path: ONE segmented Pallas reduction over all parameters.
        names = list(self.params.keys())
        ws = tuple(self.params[n] for n in names)
        if from_init:
            inits = tuple(self.init_parameters[n] for n in names)
            vals = batched_l2_diff_norms(inits, ws)
        else:
            vals = batched_l2_norms(*ws)
        return {name: vals[k] for k, name in enumerate(names)}

    def set_alphas(self, alphas):
        self.alphas = alphas

    def set_edge_weights(self, edges):
        self.edges = edges

    # Host-side discrete genotype parsing (argsort-based control flow) — numpy,
    # verbatim semantics of the PyTorch/numpy original.
    def _parse(self, weights, deleted_zero=False, withnone=False):
        n = 2
        start = 0
        pick_up_num = 2
        weight_divide_indexes = []
        for i in range(self._nodes):
            end = start + n
            weight_divide_indexes.append([start, end])
            n = n + 1
            start = end
        gene = []
        for i, (start, end) in enumerate(weight_divide_indexes):
            W = weights[start:end].copy()
            node_information = []
            for i, line in enumerate(W):
                arg_sort_idx = np.argsort(line)
                argmax_in_this_line = arg_sort_idx[-1]
                max_val_in_possible = line[argmax_in_this_line] / (np.sum(line) + 1e-05)
                if (self.op_names[argmax_in_this_line] == "none"
                        and max_val_in_possible < 0.98 or not withnone):
                    argmax_in_this_line = arg_sort_idx[-2]
                max_val_in_this_line = line[argmax_in_this_line]
                ops_for_max_val_in_this_line = self.op_names[argmax_in_this_line]
                node_information.append(
                    [i, max_val_in_this_line, argmax_in_this_line,
                     ops_for_max_val_in_this_line])
            node_information_not_none = [k for k in node_information if k[-1] != "none"]
            line_order = np.argsort([k[1] for k in node_information_not_none])[::-1]
            if len(line_order) < pick_up_num:
                active_ind = [node_information_not_none[idx][0] for idx in line_order]
                node_information_is_none = [k for k in node_information if k[-1] == "none"]
                line_order = np.argsort([k[1] for k in node_information_is_none])[::-1]
                for idx in line_order:
                    if len(active_ind) >= pick_up_num:
                        break
                    active_ind.append(node_information_is_none[idx][0])
            else:
                active_ind = [node_information_not_none[idx][0]
                              for idx in line_order[:pick_up_num]]
            for j in active_ind:
                ops_best_idx = np.argmax(W[j])
                if W[j].sum() < 1e-06 and deleted_zero:
                    gene.append(("deleted", j))
                else:
                    gene.append((self.op_names[ops_best_idx], j))
        return gene

    def genotype(self, weights, **kargs):
        normal_weights = weights["normal"]
        reduce_weights = weights["reduce"]
        gene_normal = self._parse(normal_weights, **kargs)
        gene_reduce = self._parse(reduce_weights, **kargs)
        concat = range(2 + self._nodes - self._multiplier, self._nodes + 2)
        return Genotype(normal=gene_normal, normal_concat=concat,
                        reduce=gene_reduce, reduce_concat=concat,
                        init_channels=self._C, num_classes=self._num_classes,
                        layers=self._layers, nodes=self._steps)


# --------------------------------- main ---------------------------------------
if __name__ == "__main__":
    net = SuperNetwork(C=4, num_classes=10, nodes=4, layers=2)
    net.store_init_weights()

    # norm of every parameter (one batched Pallas kernel) vs. plain-JAX reference
    norms = net.compute_norm(from_init=False)
    for name, w in net.named_parameters():
        ref = float(jnp.linalg.norm(jnp.ravel(w).astype(jnp.float32)))
        got = float(norms[name])
        assert abs(got - ref) <= 1e-4 * (1.0 + ref), (name, got, ref)

    # perturb weights, then norm of (init - w) (one batched Pallas kernel)
    net.params = {k: v + 0.01 for k, v in net.params.items()}
    norms_from_init = net.compute_norm(from_init=True)
    for name, w in net.named_parameters():
        ref = float(jnp.linalg.norm(
            jnp.ravel(net.init_parameters[name] - w).astype(jnp.float32)))
        got = float(norms_from_init[name])
        assert abs(got - ref) <= 1e-4 * (1.0 + ref), (name, got, ref)

    jax.block_until_ready(list(norms.values()) + list(norms_from_init.values()))

    # host-side genotype parse on softmax(alphas)
    w = {
        "normal": np.asarray(jax.nn.softmax(net.params["alphas_normal"], axis=-1)),
        "reduce": np.asarray(jax.nn.softmax(net.params["alphas_reduce"], axis=-1)),
    }
    geno = net.genotype(w)
    assert len(geno.normal) == 2 * net._nodes
    assert len(geno.reduce) == 2 * net._nodes

    print("KERNEL_OK")
</pallas_src>

<mosaic_0001>
module attributes {stable_mosaic.version = 11 : i64} {
  func.func @_seg_norm_kernel(%arg0: i32, %arg1: memref<5xi32, #tpu.memory_space<smem>>, %arg2: memref<1024x128xf32, #tpu.memory_space<vmem>>, %arg3: memref<1x128xf32, #tpu.memory_space<vmem>>, %arg4: memref<1x128xf32, #tpu.memory_space<vmem>>) attributes {dimension_semantics = [#tpu.dimension_semantics<arbitrary>], iteration_bounds = array<i64: 5>, scalar_prefetch = 1 : i64, scratch_operands = 1 : i64, tpu.core_type = #tpu.core_type<tc>, window_params = [{transform_indices = @transform_0, window_bounds = array<i64: 1024, 128>}, {pipeline_mode = #tpu.pipeline_mode<synchronous>, transform_indices = @transform_1, window_bounds = array<i64: 1, 128>}]} {
    %0 = arith.index_cast %arg0 : i32 to index
    %1 = memref.load %arg1[%0] : memref<5xi32, #tpu.memory_space<smem>>
    %c0_i32 = arith.constant 0 : i32
    %2 = arith.cmpi eq, %arg0, %c0_i32 : i32
    %3 = arith.extui %2 : i1 to i32
    %c0_i32_0 = arith.constant 0 : i32
    %4 = arith.cmpi ne, %3, %c0_i32_0 : i32
    scf.if %4 {
      %cst_12 = arith.constant 0.000000e+00 : f32
      %30 = vector.broadcast %cst_12 : f32 to vector<1x128xf32>
      %c0_13 = arith.constant 0 : index
      %c0_14 = arith.constant 0 : index
      %31 = vector.load %arg3[%c0_13, %c0_14] : memref<1x128xf32, #tpu.memory_space<vmem>>, vector<1x128xf32>
      tpu.vector_store %arg3[%c0_13, %c0_14], %30 {strides = array<i32>} : memref<1x128xf32, #tpu.memory_space<vmem>>, vector<1x128xf32>,
    } else {
    }
    %c1_i32 = arith.constant 1 : i32
    %5 = arith.subi %arg0, %c1_i32 : i32
    %c0_i32_1 = arith.constant 0 : i32
    %6 = arith.maxsi %5, %c0_i32_1 : i32
    %7 = arith.index_cast %6 : i32 to index
    %8 = memref.load %arg1[%7] : memref<5xi32, #tpu.memory_space<smem>>
    %c0_i32_2 = arith.constant 0 : i32
    %9 = arith.cmpi eq, %arg0, %c0_i32_2 : i32
    %10 = arith.cmpi ne, %8, %1 : i32
    %11 = arith.ori %9, %10 : i1
    %12 = arith.extui %11 : i1 to i32
    %c0_i32_3 = arith.constant 0 : i32
    %13 = arith.cmpi ne, %12, %c0_i32_3 : i32
    scf.if %13 {
      %cst_12 = arith.constant 0.000000e+00 : f32
      %30 = vector.broadcast %cst_12 : f32 to vector<1x128xf32>
      %c0_13 = arith.constant 0 : index
      %c0_14 = arith.constant 0 : index
      %31 = vector.load %arg4[%c0_13, %c0_14] : memref<1x128xf32, #tpu.memory_space<vmem>>, vector<1x128xf32>
      tpu.vector_store %arg4[%c0_13, %c0_14], %30 {strides = array<i32>} : memref<1x128xf32, #tpu.memory_space<vmem>>, vector<1x128xf32>,
    } else {
    }
    %c0 = arith.constant 0 : index
    %c0_4 = arith.constant 0 : index
    %14 = vector.load %arg2[%c0, %c0_4] : memref<1024x128xf32, #tpu.memory_space<vmem>>, vector<1024x128xf32>
    %c0_5 = arith.constant 0 : index
    %c0_6 = arith.constant 0 : index
    %15 = vector.load %arg4[%c0_5, %c0_6] : memref<1x128xf32, #tpu.memory_space<vmem>>, vector<1x128xf32>
    %16 = arith.mulf %14, %14 : vector<1024x128xf32>
    %cst = arith.constant dense<0.000000e+00> : vector<128xf32>
    %17 = vector.multi_reduction <add>, %16, %cst [0] : vector<1024x128xf32> to vector<128xf32>
    %18 = vector.shape_cast %17 : vector<128xf32> to vector<1x128xf32>
    %19 = arith.addf %15, %18 : vector<1x128xf32>
    %c0_7 = arith.constant 0 : index
    %c0_8 = arith.constant 0 : index
    %20 = vector.load %arg4[%c0_7, %c0_8] : memref<1x128xf32, #tpu.memory_space<vmem>>, vector<1x128xf32>
    tpu.vector_store %arg4[%c0_7, %c0_8], %19 {strides = array<i32>} : memref<1x128xf32, #tpu.memory_space<vmem>>, vector<1x128xf32>,
    %c1_i32_9 = arith.constant 1 : i32
    %21 = arith.addi %arg0, %c1_i32_9 : i32
    %c4_i32 = arith.constant 4 : i32
    %22 = arith.minsi %21, %c4_i32 : i32
    %23 = arith.index_cast %22 : i32 to index
    %24 = memref.load %arg1[%23] : memref<5xi32, #tpu.memory_space<smem>>
    %c4_i32_10 = arith.constant 4 : i32
    %25 = arith.cmpi eq, %arg0, %c4_i32_10 : i32
    %26 = arith.cmpi ne, %24, %1 : i32
    %27 = arith.ori %25, %26 : i1
    %28 = arith.extui %27 : i1 to i32
    %c0_i32_11 = arith.constant 0 : i32
    %29 = arith.cmpi ne, %28, %c0_i32_11 : i32
    scf.if %29 {
      %c0_12 = arith.constant 0 : index
      %c0_13 = arith.constant 0 : index
      %30 = vector.load %arg4[%c0_12, %c0_13] : memref<1x128xf32, #tpu.memory_space<vmem>>, vector<1x128xf32>
      %31 = vector.shape_cast %30 : vector<1x128xf32> to vector<1x1x128xf32>
      %cst_14 = arith.constant dense<0.000000e+00> : vector<1xf32>
      %32 = vector.multi_reduction <add>, %31, %cst_14 [1, 2] : vector<1x1x128xf32> to vector<1xf32>
      %33 = vector.shape_cast %32 : vector<1xf32> to vector<1x1x1xf32>
      %34 = vector.extract %33[0, 0, 0] : f32 from vector<1x1x1xf32>
      %35 = math.sqrt %34 : f32
      %36 = tpu.iota {dimensions = array<i32: 1>} : vector<1x128xi32>
      %37 = vector.broadcast %1 : i32 to vector<1x128xi32>
      %38 = arith.cmpi eq, %36, %37 : vector<1x128xi32>
      %c0_15 = arith.constant 0 : index
      %c0_16 = arith.constant 0 : index
      %39 = vector.load %arg3[%c0_15, %c0_16] : memref<1x128xf32, #tpu.memory_space<vmem>>, vector<1x128xf32>
      %40 = vector.broadcast %35 : f32 to vector<1x128xf32>
      %41 = arith.select %38, %40, %39 : vector<1x128xi1>, vector<1x128xf32>
      %c0_17 = arith.constant 0 : index
      %c0_18 = arith.constant 0 : index
      %42 = vector.load %arg3[%c0_17, %c0_18] : memref<1x128xf32, #tpu.memory_space<vmem>>, vector<1x128xf32>
      tpu.vector_store %arg3[%c0_17, %c0_18], %41 {strides = array<i32>} : memref<1x128xf32, #tpu.memory_space<vmem>>, vector<1x128xf32>,
    } else {
    }
    return
  }
  func.func @transform_0(%arg0: i32, %arg1: memref<5xi32, #tpu.memory_space<smem>>) -> (i32, i32) {
    %c0_i32 = arith.constant 0 : i32
    %c0_i32_0 = arith.constant 0 : i32
    return %arg0, %c0_i32 : i32, i32
  }
  func.func @transform_1(%arg0: i32, %arg1: memref<5xi32, #tpu.memory_space<smem>>) -> (i32, i32) {
    %c0_i32 = arith.constant 0 : i32
    %c0_i32_0 = arith.constant 0 : i32
    %c0_i32_1 = arith.constant 0 : i32
    return %c0_i32, %c0_i32_0 : i32, i32
  }
}

</mosaic_0001>

<llo_original>
// kernel: batched_l2_norms.1
$region0: #{batched_l2_norms.1}
  #allocation0 [shape = 'u32[]', space=smem, size = 0x4, offset = 0x4, fixed_abs, tag = 'smem constant byte address 0x4 - core index']
  #allocation1 [shape = 'u32[72,128]{1,0:T(1,128)}', space=vmem, size = 0x9000, scoped, tag = 'internal scratch']
  #allocation2 [shape = 'f32[1,128]{1,0:T(1,128)}', space=vmem, size = 0x200, scoped, tag = 'scratch operand']
  #allocation3 [shape = 's32[1]{0}', space=sflag, size = 0x4, scoped, tag = 'scoped memory for batched_l2_norms.1']
  #allocation4 [shape = 'u8[512]{0}', space=smem, size = 0x200, scoped, tag = 'prefetched SMEM operand 0']
  %s0 = inlined_call_operand.vmem [shape: s32[5], index: 0, kind: input, shape index: {}]
  %s1 = inlined_call_operand.vmem [shape: f32[5120,128], index: 1, kind: input, shape index: {}]
  %s2 = inlined_call_operand.vmem [shape: f32[1,128], index: 2, kind: output, shape index: {}]
  %s3 = sld [smem:[#allocation0]]
  $region49: #{batched_l2_norms.1} parent=0
    _
  %s5 = ssub.s32 1, %s3
  %s6 = scalar_select 0, %s5, %s3
  %s8 = sshll.u32 %s0, 4
  %s9 = int_to_ptr.vmem [resolvable:$true] %s8
  %11 = dma.vmem_to_smem %s9, 16, [#allocation4], [#allocation3]
  %13 = dma.done [#allocation3], 16
  %14 = sfence
  loop: start=0, step=1, limit=7
  $region2: #{batched_l2_norms.1} parent=0 // loop_pre_header
    _
  $region3: #{batched_l2_norms.1} parent=0 // loop_header
    %s16 = sphi 0, %s20
    %p17 = scmp.ge.s32.totalorder %s16, 7
    %s26 = sphi 0, %s28
    %s29 = sphi 0, %s26
    %s30 = sphi 0, %s29
    %s46 = sphi 0, %s30
    %s50 = sphi 0, %s50
    %s52 = sphi 0, %s50
    %s53 = sphi 0, %s52
    %s67 = sphi 0, %s53
  $region4: #{batched_l2_norms.1} parent=0 // loop_header_branch
    %19 = sbr.rel (%p17) target = $region8
  $region5: #{batched_l2_norms.1} parent=0 // loop_body
    %s21 = ssub.s32 %s16, 1
    %s22 = ssub.s32 %s16, 2
    %s23 = sadd.s32 %s16, 1
    %s24 = ssub.s32 %s16, %s23
    %p25 = scmp.eq.s32.totalorder %s24, 0
    %s27 = sadd.s32 %s26, 1
    %s28 = scalar_select %p25, %s26, %s27
    %p31 = pneg %p25
    %p32 = scmp.eq.s32.totalorder %s16, 4
    %p33 = por %p31, %p32
    %p34 = scmp.ne.s32.totalorder %s26, %s29
    %p35 = scmp.eq.s32.totalorder %s16, 0
    %p36 = por %p34, %p35
    %p37 = scmp.ne.s32.totalorder %s26, %s29
    %p38 = scmp.eq.s32.totalorder %s21, 4
    %p39 = por %p37, %p38
    %p40 = scmp.ne.s32.totalorder %s29, %s30
    %p41 = scmp.eq.s32.totalorder %s21, 0
    %p42 = por %p40, %p41
    %p43 = scmp.ne.s32.totalorder %s29, %s30
    %p44 = scmp.eq.s32.totalorder %s22, 4
    %p45 = por %p43, %p44
    %p47 = scmp.ne.s32.totalorder %s30, %s46
    %p48 = scmp.eq.s32.totalorder %s22, 0
    %p49 = por %p47, %p48
    %s51 = sadd.s32 %s50, 1
    %p54 = scmp.eq.s32.totalorder %s16, 4
    %p55 = scmp.ne.s32.totalorder %s50, %s52
    %p56 = scmp.eq.s32.totalorder %s16, 0
    %p57 = por %p55, %p56
    %p58 = scmp.ne.s32.totalorder %s50, %s52
    %p59 = scmp.eq.s32.totalorder %s21, 4
    %p60 = por %p58, %p59
    %p61 = scmp.ne.s32.totalorder %s52, %s53
    %p62 = scmp.eq.s32.totalorder %s21, 0
    %p63 = por %p61, %p62
    %p64 = scmp.ne.s32.totalorder %s52, %s53
    %p65 = scmp.eq.s32.totalorder %s22, 4
    %p66 = por %p64, %p65
    %p68 = scmp.ne.s32.totalorder %s53, %s67
    %p69 = scmp.eq.s32.totalorder %s22, 0
    %p70 = por %p68, %p69
    %p71 = scmp.le.s32.totalorder 1, %s16
    %p72 = scmp.lt.s32.totalorder %s16, 6
    %p73 = pnand %p71, %p72
    %p74 = pneg %p73
    // Predicated region
    $region9: #{batched_l2_norms.1} parent=5 // pred_check
      _
    $region10: #{batched_l2_norms.1} parent=5 // pred_check_branch
      %76 = sbr.rel (%p73) target = $region12
    $region11: #{batched_l2_norms.1} parent=5 // pred_region
      %s77 = ssub.s32 %s16, 1
    $region12: #{batched_l2_norms.1} parent=5 // pred_fallthru
      _
    %p78 = scmp.lt.s32.totalorder %s16, 5
    // Predicated region
    $region13: #{batched_l2_norms.1} parent=5 // pred_check
      %p79 = pneg %p78
    $region14: #{batched_l2_norms.1} parent=5 // pred_check_branch
      %81 = sbr.rel (%p79) target = $region16
    $region15: #{batched_l2_norms.1} parent=5 // pred_region
      // Predicated region
      $region17: #{batched_l2_norms.1} parent=15 // pred_check
        %p82 = pneg %p36
      $region18: #{batched_l2_norms.1} parent=15 // pred_check_branch
        %84 = sbr.rel (%p82) target = $region20
      $region19: #{batched_l2_norms.1} parent=15 // pred_region
        %s85 = smul.u32 128, %s16
        %p86 = scmp.lt.s32.totalorder %s85, 639
        %s87 = scalar_select %p86, %s85, 639
        %s88 = smul.addr %s87, 8
        %s89 = scalar_lea.vmem %s1, %s88
        %s90 = smul.u32 128, %s16
      $region20: #{batched_l2_norms.1} parent=15 // pred_fallthru
        _
    $region16: #{batched_l2_norms.1} parent=5 // pred_fallthru
      _
    %p91 = scmp.le.s32.totalorder 1, %s16
    %p92 = scmp.lt.s32.totalorder %s16, 6
    %p93 = pnand %p91, %p92
    %p94 = pneg %p93
    // Predicated region
    $region21: #{batched_l2_norms.1} parent=5 // pred_check
      _
    $region22: #{batched_l2_norms.1} parent=5 // pred_check_branch
      %96 = sbr.rel (%p93) target = $region24
    $region23: #{batched_l2_norms.1} parent=5 // pred_region
      %s97 = ssub.s32 %s16, 1
      %s98 = smul.u32 128, %s21
      %p99 = scmp.lt.s32.totalorder %s98, 639
      %s100 = scalar_select %p99, %s98, 639
      %s101 = smul.addr %s100, 8
      %s102 = scalar_lea.vmem %s1, %s101
      %p103 = pneg %p42
      %p104 = pneg %p39
      %p105 = pneg %p63
      %p106 = pneg %p60
      %s107 = smul.u32 128, %s21
      %p108 = scmp.lt.s32.totalorder %s107, 639
      %s109 = scalar_select %p108, %s107, 639
      %s110 = smul.addr %s109, 8
      %s111 = scalar_lea.vmem %s1, %s110
      %s112 = smul.u32 128, %s21
      %s113 = sld [smem:[#allocation4 + %s21]]
      %p114 = scmp.eq.s32.totalorder %s21, 0
      // Predicated region
      $region25: #{batched_l2_norms.1} parent=23 // pred_check
        %p115 = pneg %p114
      $region26: #{batched_l2_norms.1} parent=23 // pred_check_branch
        %117 = sbr.rel (%p115) target = $region28
      $region27: #{batched_l2_norms.1} parent=23 // pred_region
        %118 = vst [vmem:[%s2] sm:$0x1] 0.0
      $region28: #{batched_l2_norms.1} parent=23 // pred_fallthru
        _
      %s119 = ssub.s32 %s21, 1
      %p120 = scmp.gt.s32.totalorder %s119, 0
      %s121 = scalar_select %p120, %s119, 0
      %s122 = sld [smem:[#allocation4 + %s121]]
      %p123 = scmp.ne.s32.totalorder %s122, %s113
      %p124 = por %p114, %p123
      // Predicated region
      $region29: #{batched_l2_norms.1} parent=23 // pred_check
        %p125 = pneg %p124
      $region30: #{batched_l2_norms.1} parent=23 // pred_check_branch
        %127 = sbr.rel (%p125) target = $region32
      $region31: #{batched_l2_norms.1} parent=23 // pred_region
        %128 = vst [vmem:[#allocation2] sm:$0x1] 0.0
      $region32: #{batched_l2_norms.1} parent=23 // pred_fallthru
        _
      %v129 = vld [vmem:[%s111] sm:$0xff]
      %v130 = vld [vmem:[%s111 + $0x8] sm:$0xff]
      %v131 = vld [vmem:[%s111 + $0x10] sm:$0xff]
      %v132 = vld [vmem:[%s111 + $0x18] sm:$0xff]
      %v133 = vld [vmem:[%s111 + $0x20] sm:$0xff]
      %v134 = vld [vmem:[%s111 + $0x28] sm:$0xff]
      %v135 = vld [vmem:[%s111 + $0x30] sm:$0xff]
      %v136 = vld [vmem:[%s111 + $0x38] sm:$0xff]
      %v137 = vld [vmem:[%s111 + $0x40] sm:$0xff]
      %v138 = vld [vmem:[%s111 + $0x48] sm:$0xff]
      %v139 = vld [vmem:[%s111 + $0x50] sm:$0xff]
      %v140 = vld [vmem:[%s111 + $0x58] sm:$0xff]
      %v141 = vld [vmem:[%s111 + $0x60] sm:$0xff]
      %v142 = vld [vmem:[%s111 + $0x68] sm:$0xff]
      %v143 = vld [vmem:[%s111 + $0x70] sm:$0xff]
      %v144 = vld [vmem:[%s111 + $0x78] sm:$0xff]
      %v145 = vld [vmem:[%s111 + $0x80] sm:$0xff]
      %v146 = vld [vmem:[%s111 + $0x88] sm:$0xff]
      %v147 = vld [vmem:[%s111 + $0x90] sm:$0xff]
      %v148 = vld [vmem:[%s111 + $0x98] sm:$0xff]
      %v149 = vld [vmem:[%s111 + $0xa0] sm:$0xff]
      %v150 = vld [vmem:[%s111 + $0xa8] sm:$0xff]
      %v151 = vld [vmem:[%s111 + $0xb0] sm:$0xff]
      %v152 = vld [vmem:[%s111 + $0xb8] sm:$0xff]
      %v153 = vld [vmem:[%s111 + $0xc0] sm:$0xff]
      %v154 = vld [vmem:[%s111 + $0xc8] sm:$0xff]
      %v155 = vld [vmem:[%s111 + $0xd0] sm:$0xff]
      %v156 = vld [vmem:[%s111 + $0xd8] sm:$0xff]
      %v157 = vld [vmem:[%s111 + $0xe0] sm:$0xff]
      %v158 = vld [vmem:[%s111 + $0xe8] sm:$0xff]
      %v159 = vld [vmem:[%s111 + $0xf0] sm:$0xff]
      %v160 = vld [vmem:[%s111 + $0xf8] sm:$0xff]
      %v161 = vld [vmem:[%s111 + $0x100] sm:$0xff]
      %v162 = vld [vmem:[%s111 + $0x108] sm:$0xff]
      %v163 = vld [vmem:[%s111 + $0x110] sm:$0xff]
      %v164 = vld [vmem:[%s111 + $0x118] sm:$0xff]
      %v165 = vld [vmem:[%s111 + $0x120] sm:$0xff]
      %v166 = vld [vmem:[%s111 + $0x128] sm:$0xff]
      %v167 = vld [vmem:[%s111 + $0x130] sm:$0xff]
      %v168 = vld [vmem:[%s111 + $0x138] sm:$0xff]
      %v169 = vld [vmem:[%s111 + $0x140] sm:$0xff]
      %v170 = vld [vmem:[%s111 + $0x148] sm:$0xff]
      %v171 = vld [vmem:[%s111 + $0x150] sm:$0xff]
      %v172 = vld [vmem:[%s111 + $0x158] sm:$0xff]
      %v173 = vld [vmem:[%s111 + $0x160] sm:$0xff]
      %v174 = vld [vmem:[%s111 + $0x168] sm:$0xff]
      %v175 = vld [vmem:[%s111 + $0x170] sm:$0xff]
      %v176 = vld [vmem:[%s111 + $0x178] sm:$0xff]
      %v177 = vld [vmem:[%s111 + $0x180] sm:$0xff]
      %v178 = vld [vmem:[%s111 + $0x188] sm:$0xff]
      %v179 = vld [vmem:[%s111 + $0x190] sm:$0xff]
      %v180 = vld [vmem:[%s111 + $0x198] sm:$0xff]
      %v181 = vld [vmem:[%s111 + $0x1a0] sm:$0xff]
      %v182 = vld [vmem:[%s111 + $0x1a8] sm:$0xff]
      %v183 = vld [vmem:[%s111 + $0x1b0] sm:$0xff]
      %v184 = vld [vmem:[%s111 + $0x1b8] sm:$0xff]
      %v185 = vld [vmem:[%s111 + $0x1c0] sm:$0xff]
      %v186 = vld [vmem:[%s111 + $0x1c8] sm:$0xff]
      %v187 = vld [vmem:[%s111 + $0x1d0] sm:$0xff]
      %v188 = vld [vmem:[%s111 + $0x1d8] sm:$0xff]
      %v189 = vld [vmem:[%s111 + $0x1e0] sm:$0xff]
      %v190 = vld [vmem:[%s111 + $0x1e8] sm:$0xff]
      %v191 = vld [vmem:[%s111 + $0x1f0] sm:$0xff]
      %v192 = vld [vmem:[%s111 + $0x1f8] sm:$0xff]
      %v193 = vld [vmem:[%s111 + $0x200] sm:$0xff]
      %v194 = vld [vmem:[%s111 + $0x208] sm:$0xff]
      %v195 = vld [vmem:[%s111 + $0x210] sm:$0xff]
      %v196 = vld [vmem:[%s111 + $0x218] sm:$0xff]
      %v197 = vld [vmem:[%s111 + $0x220] sm:$0xff]
      %v198 = vld [vmem:[%s111 + $0x228] sm:$0xff]
      %v199 = vld [vmem:[%s111 + $0x230] sm:$0xff]
      %v200 = vld [vmem:[%s111 + $0x238] sm:$0xff]
      %v201 = vld [vmem:[%s111 + $0x240] sm:$0xff]
      %v202 = vld [vmem:[%s111 + $0x248] sm:$0xff]
      %v203 = vld [vmem:[%s111 + $0x250] sm:$0xff]
      %v204 = vld [vmem:[%s111 + $0x258] sm:$0xff]
      %v205 = vld [vmem:[%s111 + $0x260] sm:$0xff]
      %v206 = vld [vmem:[%s111 + $0x268] sm:$0xff]
      %v207 = vld [vmem:[%s111 + $0x270] sm:$0xff]
      %v208 = vld [vmem:[%s111 + $0x278] sm:$0xff]
      %v209 = vld [vmem:[%s111 + $0x280] sm:$0xff]
      %v210 = vld [vmem:[%s111 + $0x288] sm:$0xff]
      %v211 = vld [vmem:[%s111 + $0x290] sm:$0xff]
      %v212 = vld [vmem:[%s111 + $0x298] sm:$0xff]
      %v213 = vld [vmem:[%s111 + $0x2a0] sm:$0xff]
      %v214 = vld [vmem:[%s111 + $0x2a8] sm:$0xff]
      %v215 = vld [vmem:[%s111 + $0x2b0] sm:$0xff]
      %v216 = vld [vmem:[%s111 + $0x2b8] sm:$0xff]
      %v217 = vld [vmem:[%s111 + $0x2c0] sm:$0xff]
      %v218 = vld [vmem:[%s111 + $0x2c8] sm:$0xff]
      %v219 = vld [vmem:[%s111 + $0x2d0] sm:$0xff]
      %v220 = vld [vmem:[%s111 + $0x2d8] sm:$0xff]
      %v221 = vld [vmem:[%s111 + $0x2e0] sm:$0xff]
      %v222 = vld [vmem:[%s111 + $0x2e8] sm:$0xff]
      %v223 = vld [vmem:[%s111 + $0x2f0] sm:$0xff]
      %v224 = vld [vmem:[%s111 + $0x2f8] sm:$0xff]
      %v225 = vld [vmem:[%s111 + $0x300] sm:$0xff]
      %v226 = vld [vmem:[%s111 + $0x308] sm:$0xff]
      %v227 = vld [vmem:[%s111 + $0x310] sm:$0xff]
      %v228 = vld [vmem:[%s111 + $0x318] sm:$0xff]
      %v229 = vld [vmem:[%s111 + $0x320] sm:$0xff]
      %v230 = vld [vmem:[%s111 + $0x328] sm:$0xff]
      %v231 = vld [vmem:[%s111 + $0x330] sm:$0xff]
      %v232 = vld [vmem:[%s111 + $0x338] sm:$0xff]
      %v233 = vld [vmem:[%s111 + $0x340] sm:$0xff]
      %v234 = vld [vmem:[%s111 + $0x348] sm:$0xff]
      %v235 = vld [vmem:[%s111 + $0x350] sm:$0xff]
      %v236 = vld [vmem:[%s111 + $0x358] sm:$0xff]
      %v237 = vld [vmem:[%s111 + $0x360] sm:$0xff]
      %v238 = vld [vmem:[%s111 + $0x368] sm:$0xff]
      %v239 = vld [vmem:[%s111 + $0x370] sm:$0xff]
      %v240 = vld [vmem:[%s111 + $0x378] sm:$0xff]
      %v241 = vld [vmem:[%s111 + $0x380] sm:$0xff]
      %v242 = vld [vmem:[%s111 + $0x388] sm:$0xff]
      %v243 = vld [vmem:[%s111 + $0x390] sm:$0xff]
      %v244 = vld [vmem:[%s111 + $0x398] sm:$0xff]
      %v245 = vld [vmem:[%s111 + $0x3a0] sm:$0xff]
      %v246 = vld [vmem:[%s111 + $0x3a8] sm:$0xff]
      %v247 = vld [vmem:[%s111 + $0x3b0] sm:$0xff]
      %v248 = vld [vmem:[%s111 + $0x3b8] sm:$0xff]
      %v249 = vld [vmem:[%s111 + $0x3c0] sm:$0xff]
      %v250 = vld [vmem:[%s111 + $0x3c8] sm:$0xff]
      %v251 = vld [vmem:[%s111 + $0x3d0] sm:$0xff]
      %v252 = vld [vmem:[%s111 + $0x3d8] sm:$0xff]
      %v253 = vld [vmem:[%s111 + $0x3e0] sm:$0xff]
      %v254 = vld [vmem:[%s111 + $0x3e8] sm:$0xff]
      %v255 = vld [vmem:[%s111 + $0x3f0] sm:$0xff]
      %v256 = vld [vmem:[%s111 + $0x3f8] sm:$0xff]
      %v257 = vld [vmem:[#allocation2] sm:$0x1]
      %v258 = vmul.f32 %v129, %v129
      %v259 = vmul.f32 %v130, %v130
      %v260 = vmul.f32 %v131, %v131
      %v261 = vmul.f32 %v132, %v132
      %v262 = vmul.f32 %v133, %v133
      %v263 = vmul.f32 %v134, %v134
      %v264 = vmul.f32 %v135, %v135
      %v265 = vmul.f32 %v136, %v136
      %v266 = vmul.f32 %v137, %v137
      %v267 = vmul.f32 %v138, %v138
      %v268 = vmul.f32 %v139, %v139
      %v269 = vmul.f32 %v140, %v140
      %v270 = vmul.f32 %v141, %v141
      %v271 = vmul.f32 %v142, %v142
      %v272 = vmul.f32 %v143, %v143
      %v273 = vmul.f32 %v144, %v144
      %v274 = vmul.f32 %v145, %v145
      %v275 = vmul.f32 %v146, %v146
      %v276 = vmul.f32 %v147, %v147
      %v277 = vmul.f32 %v148, %v148
      %v278 = vmul.f32 %v149, %v149
      %v279 = vmul.f32 %v150, %v150
      %v280 = vmul.f32 %v151, %v151
      %v281 = vmul.f32 %v152, %v152
      %v282 = vmul.f32 %v153, %v153
      %v283 = vmul.f32 %v154, %v154
      %v284 = vmul.f32 %v155, %v155
      %v285 = vmul.f32 %v156, %v156
      %v286 = vmul.f32 %v157, %v157
      %v287 = vmul.f32 %v158, %v158
      %v288 = vmul.f32 %v159, %v159
      %v289 = vmul.f32 %v160, %v160
      %v290 = vmul.f32 %v161, %v161
      %v291 = vmul.f32 %v162, %v162
      %v292 = vmul.f32 %v163, %v163
      %v293 = vmul.f32 %v164, %v164
      %v294 = vmul.f32 %v165, %v165
      %v295 = vmul.f32 %v166, %v166
      %v296 = vmul.f32 %v167, %v167
      %v297 = vmul.f32 %v168, %v168
      %v298 = vmul.f32 %v169, %v169
      %v299 = vmul.f32 %v170, %v170
      %v300 = vmul.f32 %v171, %v171
      %v301 = vmul.f32 %v172, %v172
      %v302 = vmul.f32 %v173, %v173
      %v303 = vmul.f32 %v174, %v174
      %v304 = vmul.f32 %v175, %v175
      %v305 = vmul.f32 %v176, %v176
      %v306 = vmul.f32 %v177, %v177
      %v307 = vmul.f32 %v178, %v178
      %v308 = vmul.f32 %v179, %v179
      %v309 = vmul.f32 %v180, %v180
      %v310 = vmul.f32 %v181, %v181
      %v311 = vmul.f32 %v182, %v182
      %v312 = vmul.f32 %v183, %v183
      %v313 = vmul.f32 %v184, %v184
      %v314 = vmul.f32 %v185, %v185
      %v315 = vmul.f32 %v186, %v186
      %v316 = vmul.f32 %v187, %v187
      %v317 = vmul.f32 %v188, %v188
      %v318 = vmul.f32 %v189, %v189
      %v319 = vmul.f32 %v190, %v190
      %v320 = vmul.f32 %v191, %v191
      %v321 = vmul.f32 %v192, %v192
      %v322 = vmul.f32 %v193, %v193
      %v323 = vmul.f32 %v194, %v194
      %v324 = vmul.f32 %v195, %v195
      %v325 = vmul.f32 %v196, %v196
      %v326 = vmul.f32 %v197, %v197
      %v327 = vmul.f32 %v198, %v198
      %v328 = vmul.f32 %v199, %v199
      %v329 = vmul.f32 %v200, %v200
      %v330 = vmul.f32 %v201, %v201
      %v331 = vmul.f32 %v202, %v202
      %v332 = vmul.f32 %v203, %v203
      %v333 = vmul.f32 %v204, %v204
      %v334 = vmul.f32 %v205, %v205
      %v335 = vmul.f32 %v206, %v206
      %v336 = vmul.f32 %v207, %v207
      %v337 = vmul.f32 %v208, %v208
      %v338 = vmul.f32 %v209, %v209
      %v339 = vmul.f32 %v210, %v210
      %v340 = vmul.f32 %v211, %v211
      %v341 = vmul.f32 %v212, %v212
      %v342 = vmul.f32 %v213, %v213
      %v343 = vmul.f32 %v214, %v214
      %v344 = vmul.f32 %v215, %v215
      %v345 = vmul.f32 %v216, %v216
      %v346 = vmul.f32 %v217, %v217
      %v347 = vmul.f32 %v218, %v218
      %v348 = vmul.f32 %v219, %v219
      %v349 = vmul.f32 %v220, %v220
      %v350 = vmul.f32 %v221, %v221
      %v351 = vmul.f32 %v222, %v222
      %v352 = vmul.f32 %v223, %v223
      %v353 = vmul.f32 %v224, %v224
      %v354 = vmul.f32 %v225, %v225
      %v355 = vmul.f32 %v226, %v226
      %v356 = vmul.f32 %v227, %v227
      %v357 = vmul.f32 %v228, %v228
      %v358 = vmul.f32 %v229, %v229
      %v359 = vmul.f32 %v230, %v230
      %v360 = vmul.f32 %v231, %v231
      %v361 = vmul.f32 %v232, %v232
      %v362 = vmul.f32 %v233, %v233
      %v363 = vmul.f32 %v234, %v234
      %v364 = vmul.f32 %v235, %v235
      %v365 = vmul.f32 %v236, %v236
      %v366 = vmul.f32 %v237, %v237
      %v367 = vmul.f32 %v238, %v238
      %v368 = vmul.f32 %v239, %v239
      %v369 = vmul.f32 %v240, %v240
      %v370 = vmul.f32 %v241, %v241
      %v371 = vmul.f32 %v242, %v242
      %v372 = vmul.f32 %v243, %v243
      %v373 = vmul.f32 %v244, %v244
      %v374 = vmul.f32 %v245, %v245
      %v375 = vmul.f32 %v246, %v246
      %v376 = vmul.f32 %v247, %v247
      %v377 = vmul.f32 %v248, %v248
      %v378 = vmul.f32 %v249, %v249
      %v379 = vmul.f32 %v250, %v250
      %v380 = vmul.f32 %v251, %v251
      %v381 = vmul.f32 %v252, %v252
      %v382 = vmul.f32 %v253, %v253
      %v383 = vmul.f32 %v254, %v254
      %v384 = vmul.f32 %v255, %v255
      %v385 = vmul.f32 %v256, %v256
      %v386 = vadd.f32 %v258, %v259
      %v387 = vadd.f32 %v386, %v260
      %v388 = vadd.f32 %v387, %v261
      %v389 = vadd.f32 %v388, %v262
      %v390 = vadd.f32 %v389, %v263
      %v391 = vadd.f32 %v390, %v264
      %v392 = vadd.f32 %v391, %v265
      %v393 = vadd.f32 %v392, %v266
      %v394 = vadd.f32 %v393, %v267
      %v395 = vadd.f32 %v394, %v268
      %v396 = vadd.f32 %v395, %v269
      %v397 = vadd.f32 %v396, %v270
      %v398 = vadd.f32 %v397, %v271
      %v399 = vadd.f32 %v398, %v272
      %v400 = vadd.f32 %v399, %v273
      %v401 = vadd.f32 %v400, %v274
      %v402 = vadd.f32 %v401, %v275
      %v403 = vadd.f32 %v402, %v276
      %v404 = vadd.f32 %v403, %v277
      %v405 = vadd.f32 %v404, %v278
      %v406 = vadd.f32 %v405, %v279
      %v407 = vadd.f32 %v406, %v280
      %v408 = vadd.f32 %v407, %v281
      %v409 = vadd.f32 %v408, %v282
      %v410 = vadd.f32 %v409, %v283
      %v411 = vadd.f32 %v410, %v284
      %v412 = vadd.f32 %v411, %v285
      %v413 = vadd.f32 %v412, %v286
      %v414 = vadd.f32 %v413, %v287
      %v415 = vadd.f32 %v414, %v288
      %v416 = vadd.f32 %v415, %v289
      %v417 = vadd.f32 %v416, %v290
      %v418 = vadd.f32 %v417, %v291
      %v419 = vadd.f32 %v418, %v292
      %v420 = vadd.f32 %v419, %v293
      %v421 = vadd.f32 %v420, %v294
      %v422 = vadd.f32 %v421, %v295
      %v423 = vadd.f32 %v422, %v296
      %v424 = vadd.f32 %v423, %v297
      %v425 = vadd.f32 %v424, %v298
      %v426 = vadd.f32 %v425, %v299
      %v427 = vadd.f32 %v426, %v300
      %v428 = vadd.f32 %v427, %v301
      %v429 = vadd.f32 %v428, %v302
      %v430 = vadd.f32 %v429, %v303
      %v431 = vadd.f32 %v430, %v304
      %v432 = vadd.f32 %v431, %v305
      %v433 = vadd.f32 %v432, %v306
      %v434 = vadd.f32 %v433, %v307
      %v435 = vadd.f32 %v434, %v308
      %v436 = vadd.f32 %v435, %v309
      %v437 = vadd.f32 %v436, %v310
      %v438 = vadd.f32 %v437, %v311
      %v439 = vadd.f32 %v438, %v312
      %v440 = vadd.f32 %v439, %v313
      %v441 = vadd.f32 %v440, %v314
      %v442 = vadd.f32 %v441, %v315
      %v443 = vadd.f32 %v442, %v316
      %v444 = vadd.f32 %v443, %v317
      %v445 = vadd.f32 %v444, %v318
      %v446 = vadd.f32 %v445, %v319
      %v447 = vadd.f32 %v446, %v320
      %v448 = vadd.f32 %v447, %v321
      %v449 = vadd.f32 %v448, %v322
      %v450 = vadd.f32 %v449, %v323
      %v451 = vadd.f32 %v450, %v324
      %v452 = vadd.f32 %v451, %v325
      %v453 = vadd.f32 %v452, %v326
      %v454 = vadd.f32 %v453, %v327
      %v455 = vadd.f32 %v454, %v328
      %v456 = vadd.f32 %v455, %v329
      %v457 = vadd.f32 %v456, %v330
      %v458 = vadd.f32 %v457, %v331
      %v459 = vadd.f32 %v458, %v332
      %v460 = vadd.f32 %v459, %v333
      %v461 = vadd.f32 %v460, %v334
      %v462 = vadd.f32 %v461, %v335
      %v463 = vadd.f32 %v462, %v336
      %v464 = vadd.f32 %v463, %v337
      %v465 = vadd.f32 %v464, %v338
      %v466 = vadd.f32 %v465, %v339
      %v467 = vadd.f32 %v466, %v340
      %v468 = vadd.f32 %v467, %v341
      %v469 = vadd.f32 %v468, %v342
      %v470 = vadd.f32 %v469, %v343
      %v471 = vadd.f32 %v470, %v344
      %v472 = vadd.f32 %v471, %v345
      %v473 = vadd.f32 %v472, %v346
      %v474 = vadd.f32 %v473, %v347
      %v475 = vadd.f32 %v474, %v348
      %v476 = vadd.f32 %v475, %v349
      %v477 = vadd.f32 %v476, %v350
      %v478 = vadd.f32 %v477, %v351
      %v479 = vadd.f32 %v478, %v352
      %v480 = vadd.f32 %v479, %v353
      %v481 = vadd.f32 %v480, %v354
      %v482 = vadd.f32 %v481, %v355
      %v483 = vadd.f32 %v482, %v356
      %v484 = vadd.f32 %v483, %v357
      %v485 = vadd.f32 %v484, %v358
      %v486 = vadd.f32 %v485, %v359
      %v487 = vadd.f32 %v486, %v360
      %v488 = vadd.f32 %v487, %v361
      %v489 = vadd.f32 %v488, %v362
      %v490 = vadd.f32 %v489, %v363
      %v491 = vadd.f32 %v490, %v364
      %v492 = vadd.f32 %v491, %v365
      %v493 = vadd.f32 %v492, %v366
      %v494 = vadd.f32 %v493, %v367
      %v495 = vadd.f32 %v494, %v368
      %v496 = vadd.f32 %v495, %v369
      %v497 = vadd.f32 %v496, %v370
      %v498 = vadd.f32 %v497, %v371
      %v499 = vadd.f32 %v498, %v372
      %v500 = vadd.f32 %v499, %v373
      %v501 = vadd.f32 %v500, %v374
      %v502 = vadd.f32 %v501, %v375
      %v503 = vadd.f32 %v502, %v376
      %v504 = vadd.f32 %v503, %v377
      %v505 = vadd.f32 %v504, %v378
      %v506 = vadd.f32 %v505, %v379
      %v507 = vadd.f32 %v506, %v380
      %v508 = vadd.f32 %v507, %v381
      %v509 = vadd.f32 %v508, %v382
      %v510 = vadd.f32 %v509, %v383
      %v511 = vadd.f32 %v510, %v384
      %v512 = vadd.f32 %v511, %v385
      %v513 = vrot.slane %v512, 4
      %v514 = vadd.f32 %v512, %v513
      %v515 = vrot.slane %v514, 2
      %v516 = vadd.f32 %v514, %v515
      %v517 = vrot.slane %v516, 1
      %v518 = vadd.f32 %v516, %v517
      %v519 = vadd.f32 %v257, %v518
      %520 = vst [vmem:[#allocation2] sm:$0x1] %v519
      %s521 = sadd.s32 %s21, 1
      %p522 = scmp.lt.s32.totalorder %s521, 4
      %s523 = scalar_select %p522, %s521, 4
      %s524 = sld [smem:[#allocation4 + %s523]]
      %p525 = scmp.eq.s32.totalorder %s21, 4
      %p526 = scmp.ne.s32.totalorder %s524, %s113
      %p527 = por %p525, %p526
      // Predicated region
      $region33: #{batched_l2_norms.1} parent=23 // pred_check
        %p528 = pneg %p527
      $region34: #{batched_l2_norms.1} parent=23 // pred_check_branch
        %530 = sbr.rel (%p528) target = $region36
      $region35: #{batched_l2_norms.1} parent=23 // pred_region
        %v531 = vld [vmem:[#allocation2] sm:$0x1]
        %vm532 = vcmask 1040384
        %v533 = vsel %vm532, %v531, 0.0
        %534 = vadd.xlane.f32.xlu0 %v533
        %v535 = vpop.xlane.xlu0 %534
        %v536 = vrot.slane %v535, 4
        %v537 = vadd.f32 %v535, %v536
        %v538 = vrot.slane %v537, 2
        %v539 = vadd.f32 %v537, %v538
        %v540 = vrot.slane %v539, 1
        %v541 = vadd.f32 %v539, %v540
        %s542 = vtos %v541
        %v543 = vstv %s542
        %v544 = vrsqrt.pop %v543
        %v545 = vmul.f32 %v544, %v543
        %v546 = vmul.f32 %v545, %v544
        %v547 = vmul.f32 0.5, %v546
        %v548 = vsub.f32 1.5, %v547
        %v549 = vmul.f32 %v544, %v548
        %v550 = vmul.f32 %v543, %v549
        %vm551 = vcmp.eq.f32.partialorder %v543, inf
        %v552 = vsel %vm551, %v543, %v550
        %vm553 = vcmp.eq.f32.partialorder %v543, 0.0
        %v554 = vand.u32 %v543, 2147483648
        %v555 = vsel %vm553, %v554, %v552
        %s556 = vtos %v555
        %v557 = vlaneseq
        %v558 = vand.u32 %v557, 127
        %v559 = vstv %s113
        %vm560 = vcmp.eq.s32.totalorder %v558, %v559
        %v561 = vld [vmem:[%s2] sm:$0x1]
        %v562 = vstv %s556
        %v563 = vsel %vm560, %v562, %v561
        %564 = vst [vmem:[%s2] sm:$0x1] %v563
      $region36: #{batched_l2_norms.1} parent=23 // pred_fallthru
        _
      // Predicated region
      $region37: #{batched_l2_norms.1} parent=23 // pred_check
        %p565 = pneg %p60
      $region38: #{batched_l2_norms.1} parent=23 // pred_check_branch
        %567 = sbr.rel (%p565) target = $region40
      $region39: #{batched_l2_norms.1} parent=23 // pred_region
        _
      $region40: #{batched_l2_norms.1} parent=23 // pred_fallthru
        _
      // Predicated region
      $region41: #{batched_l2_norms.1} parent=23 // pred_check
        %p568 = pneg %p60
      $region42: #{batched_l2_norms.1} parent=23 // pred_check_branch
        %570 = sbr.rel (%p568) target = $region44
      $region43: #{batched_l2_norms.1} parent=23 // pred_region
        _
      $region44: #{batched_l2_norms.1} parent=23 // pred_fallthru
        _
    $region24: #{batched_l2_norms.1} parent=5 // pred_fallthru
      _
    %p571 = scmp.le.s32.totalorder 2, %s16
    // Predicated region
    $region45: #{batched_l2_norms.1} parent=5 // pred_check
      %p572 = pneg %p571
    $region46: #{batched_l2_norms.1} parent=5 // pred_check_branch
      %574 = sbr.rel (%p572) target = $region48
    $region47: #{batched_l2_norms.1} parent=5 // pred_region
      %s575 = ssub.s32 %s16, 2
    $region48: #{batched_l2_norms.1} parent=5 // pred_fallthru
      _
  $region6: #{batched_l2_norms.1} parent=0 // loop_footer
    %s20 = sadd.s32 1, %s16
  $region7: #{batched_l2_norms.1} parent=0 // loop_footer_branch
    %15 = sbr.rel target = $region3
  $region8: #{batched_l2_norms.1} parent=0 // loop_exit
    _

</llo_original>
